<compile_context>
chip_gen: v7x
topology: tpu7x:2x2x1
jax: 0.10.0
libtpu: 0.0.40
codegen_flags: <defaults>
</compile_context>

<pallas_src>
import jax
import jax.numpy as jnp
from jax.experimental import pallas as pl
from jax.experimental.pallas import tpu as pltpu

HIDDEN_DIM = 32
LEAKY_SLOPE = 0.01
LN_EPS = 1e-5
COMPUTE_CHUNK = 512          # lanes per in-kernel compute chunk (bounds live vregs)


def _layernorm_feat0(h, gamma, beta):
    """LayerNorm over axis 0 (features) of a [feature, lanes] tile.

    Biased variance + eps inside rsqrt -> matches torch.nn.LayerNorm.
    gamma/beta are [feature, 1] columns broadcast over the lane (batch) axis.
    """
    mu = jnp.mean(h, axis=0, keepdims=True)
    hm = h - mu                                   # centered tile, computed once
    var = jnp.mean(hm * hm, axis=0, keepdims=True)
    inv = jax.lax.rsqrt(var + LN_EPS)             # single EUP rsqrt per chunk
    return hm * inv * gamma + beta


def _make_actor_kernel(H, A, chunk, n_chunks):
    # Contract lhs dim 1 with rhs dim 1:  W[H,iD] x x[Bt,iD] -> [H,Bt]
    # (the matmul absorbs the input transpose; no explicit transpose op).
    dn = (((1,), (1,)), ((), ()))

    def kernel(x_ref, w1_ref, w2_ref, w3_ref, cols_ref, out_ref):
        w1 = w1_ref[...]                          # [H, iD]
        w2 = w2_ref[...]                          # [H, H]
        w3 = w3_ref[...]                          # [A, H]
        cols = cols_ref[...]                      # [(6H+A), 1] fused bias/LN columns
        b1, g1, be1 = cols[0:H], cols[H:2 * H], cols[2 * H:3 * H]
        b2, g2, be2 = cols[3 * H:4 * H], cols[4 * H:5 * H], cols[5 * H:6 * H]
        b3 = cols[6 * H:6 * H + A]

        def chunk_body(c, carry):
            start = pl.multiple_of(c * chunk, chunk)
            xc = x_ref[pl.ds(start, chunk), :]    # [chunk, iD] natural-layout slice

            # ---- layer 1: Linear -> LeakyReLU -> LayerNorm ----  [H, chunk]
            h = jax.lax.dot_general(w1, xc, dn,
                                    preferred_element_type=jnp.float32) + b1
            h = jnp.maximum(h, LEAKY_SLOPE * h)
            h = _layernorm_feat0(h, g1, be1)

            # ---- layer 2: Linear -> LeakyReLU -> LayerNorm ----
            h = jnp.dot(w2, h, preferred_element_type=jnp.float32) + b2
            h = jnp.maximum(h, LEAKY_SLOPE * h)
            h = _layernorm_feat0(h, g2, be2)

            # ---- policy head + log-softmax over features (axis 0) ----
            logits = jnp.dot(w3, h, preferred_element_type=jnp.float32) + b3
            m = jnp.max(logits, axis=0, keepdims=True)
            z = logits - m
            lse = jnp.log(jnp.sum(jnp.exp(z), axis=0, keepdims=True))

            # Fused lane-dense output block: rows 0..A-1 logits, rows A..2A-1 lg_sm.
            out_ref[pl.ds(0, A), pl.ds(start, chunk)] = logits
            out_ref[pl.ds(A, A), pl.ds(start, chunk)] = z - lse
            return carry

        jax.lax.fori_loop(0, n_chunks, chunk_body, None, unroll=True)

    return kernel


def _default_batch_tile(B):
    # Keep >= 2 grid steps whenever B > 128 (feeds both v7x TensorCores), and use
    # big tiles for big batches so the ~0.35 us/step pipeline overhead amortizes.
    if B <= 256:
        return 128          # 1 step for B<=128; 2 steps for 129..256
    if B <= 1024:
        return 256
    if B < 2048:
        return 512
    if B < 8192:
        return 1024
    return 2048


def actor_nw_forward(x, params, *, batch_tile=None):
    """x: [B, ip_dim] float32. Returns (pi_logit, lg_sm), each [B, num_action]."""
    x = jnp.asarray(x, jnp.float32)
    B, iD = x.shape
    w1, b1, g1, be1, w2, b2, g2, be2, w3, b3 = params
    H = w1.shape[1]
    A = w3.shape[1]

    if batch_tile is None:
        batch_tile = _default_batch_tile(B)
    assert batch_tile % 128 == 0, "batch_tile must be a multiple of 128"
    chunk = COMPUTE_CHUNK if batch_tile % COMPUTE_CHUNK == 0 else batch_tile
    n_chunks = batch_tile // chunk

    # Pad the batch to a tile multiple (zero rows are safe through LN / softmax).
    n_tiles = pl.cdiv(B, batch_tile)
    Bp = n_tiles * batch_tile
    if Bp != B:
        x = jnp.pad(x, ((0, Bp - B), (0, 0)))

    # One-time parameter plumbing only (no activation transpose in the wrapper):
    #   weights to PyTorch [out, in]; all seven bias / LN columns fused to one array.
    w1T, w2T, w3T = w1.T, w2.T, w3.T
    cols = jnp.concatenate([b1, g1, be1, b2, g2, be2, b3], axis=1).T   # [(6H+A), 1]

    grid = (n_tiles,)

    def pspec(shape):
        return pl.BlockSpec(shape, lambda i: (0, 0))

    in_specs = [
        pl.BlockSpec((batch_tile, iD), lambda i: (i, 0)),   # x: natural, contiguous HBM rows
        pspec((H, iD)),
        pspec((H, H)),
        pspec((A, H)),
        pspec((6 * H + A, 1)),
    ]
    out_specs = pl.BlockSpec((2 * A, batch_tile), lambda i: (0, i))
    out_shape = jax.ShapeDtypeStruct((2 * A, Bp), jnp.float32)

    # Advisory cost estimate so XLA schedules around this tiny custom call sanely.
    flops = 2 * Bp * (iD * H + H * H + H * A) + Bp * (16 * H + 6 * A)
    transcendentals = Bp * (A + 3)
    bytes_accessed = 4 * (Bp * iD + 2 * Bp * A + H * iD + H * H + H * A + 6 * H + A)

    fused = pl.pallas_call(
        _make_actor_kernel(H, A, chunk, n_chunks),
        grid=grid,
        in_specs=in_specs,
        out_specs=out_specs,
        out_shape=out_shape,
        compiler_params=pltpu.CompilerParams(
            dimension_semantics=("parallel",)),
        cost_estimate=pl.CostEstimate(
            flops=flops,
            transcendentals=transcendentals,
            bytes_accessed=bytes_accessed),
    )(x, w1T, w2T, w3T, cols)

    # Single un-transpose pass for both outputs, then drop the pad rows.
    # (Consumers that can take [A, B] could skip this and read `fused` directly.)
    out = fused.T
    return out[:B, :A], out[:B, A:]


def init_params(key, ip_dim, num_action, hidden=HIDDEN_DIM):
    """Deterministic synthetic init. Linear weights stored pre-transposed [in, out]."""
    ks = jax.random.split(key, 6)
    s1 = 1.0 / jnp.sqrt(ip_dim)
    s2 = 1.0 / jnp.sqrt(hidden)
    w1 = jax.random.uniform(ks[0], (ip_dim, hidden), jnp.float32, -s1, s1)
    b1 = jax.random.uniform(ks[1], (1, hidden), jnp.float32, -s1, s1)
    w2 = jax.random.uniform(ks[2], (hidden, hidden), jnp.float32, -s2, s2)
    b2 = jax.random.uniform(ks[3], (1, hidden), jnp.float32, -s2, s2)
    w3 = jax.random.uniform(ks[4], (hidden, num_action), jnp.float32, -s2, s2)
    b3 = jax.random.uniform(ks[5], (1, num_action), jnp.float32, -s2, s2)
    # LayerNorm params: PyTorch default init (weight=1, bias=0)
    g1 = jnp.ones((1, hidden), jnp.float32)
    be1 = jnp.zeros((1, hidden), jnp.float32)
    g2 = jnp.ones((1, hidden), jnp.float32)
    be2 = jnp.zeros((1, hidden), jnp.float32)
    return (w1, b1, g1, be1, w2, b2, g2, be2, w3, b3)


def reference_forward(x, params):
    """Pure-JAX reference of the same forward pass (for a sanity check)."""
    w1, b1, g1, be1, w2, b2, g2, be2, w3, b3 = params

    def ln(h, gamma, beta):
        mu = jnp.mean(h, axis=-1, keepdims=True)
        var = jnp.mean((h - mu) * (h - mu), axis=-1, keepdims=True)
        return (h - mu) * jax.lax.rsqrt(var + LN_EPS) * gamma + beta

    h = x @ w1 + b1
    h = jnp.where(h > 0, h, LEAKY_SLOPE * h)
    h = ln(h, g1, be1)
    h = h @ w2 + b2
    h = jnp.where(h > 0, h, LEAKY_SLOPE * h)
    h = ln(h, g2, be2)
    logits = h @ w3 + b3
    return logits, jax.nn.log_softmax(logits, axis=-1)


if __name__ == "__main__":
    key = jax.random.PRNGKey(0)
    kx, kp, kx2, kx3 = jax.random.split(key, 4)

    ip_dim, num_action = 16, 8
    params = init_params(kp, ip_dim, num_action)

    # --- small batch: one 128-lane tile (padded), single grid step ---
    B = 16
    x = jax.random.normal(kx, (B, ip_dim), jnp.float32)
    pi_logit, lg_sm = actor_nw_forward(x, params)
    jax.block_until_ready((pi_logit, lg_sm))

    ref_logit, ref_lg = reference_forward(x, params)
    assert pi_logit.shape == (B, num_action) and lg_sm.shape == (B, num_action)
    assert jnp.allclose(pi_logit, ref_logit, atol=1e-4, rtol=1e-4)
    assert jnp.allclose(lg_sm, ref_lg, atol=1e-4, rtol=1e-4)
    assert jnp.allclose(jnp.sum(jnp.exp(lg_sm), axis=-1), 1.0, atol=1e-4)

    # --- non-multiple batch: padding + a 2-step 'parallel' grid (both v7x TCs) ---
    B2 = 384
    x2 = jax.random.normal(kx2, (B2, ip_dim), jnp.float32)
    pi_logit2, lg_sm2 = actor_nw_forward(x2, params)
    jax.block_until_ready((pi_logit2, lg_sm2))

    ref_logit2, ref_lg2 = reference_forward(x2, params)
    assert jnp.allclose(pi_logit2, ref_logit2, atol=1e-4, rtol=1e-4)
    assert jnp.allclose(lg_sm2, ref_lg2, atol=1e-4, rtol=1e-4)

    # --- big tile path: exercises the in-kernel 512-lane chunk loop + padding ---
    B3 = 1000
    x3 = jax.random.normal(kx3, (B3, ip_dim), jnp.float32)
    pi_logit3, lg_sm3 = actor_nw_forward(x3, params, batch_tile=1024)  # 2 chunks/tile
    jax.block_until_ready((pi_logit3, lg_sm3))

    ref_logit3, ref_lg3 = reference_forward(x3, params)
    assert jnp.allclose(pi_logit3, ref_logit3, atol=1e-4, rtol=1e-4)
    assert jnp.allclose(lg_sm3, ref_lg3, atol=1e-4, rtol=1e-4)

    print("KERNEL_OK")
</pallas_src>

<mosaic_0001>
module attributes {stable_mosaic.version = 11 : i64} {
  func.func @kernel(%arg0: i32, %arg1: memref<128x16xf32, #tpu.memory_space<vmem>>, %arg2: memref<32x16xf32, #tpu.memory_space<vmem>>, %arg3: memref<32x32xf32, #tpu.memory_space<vmem>>, %arg4: memref<8x32xf32, #tpu.memory_space<vmem>>, %arg5: memref<200x1xf32, #tpu.memory_space<vmem>>, %arg6: memref<16x128xf32, #tpu.memory_space<vmem>>) attributes {dimension_semantics = [#tpu.dimension_semantics<parallel>], iteration_bounds = array<i64: 1>, scalar_prefetch = 0 : i64, scratch_operands = 0 : i64, tpu.core_type = #tpu.core_type<tc>, window_params = [{transform_indices = @transform_0, window_bounds = array<i64: 128, 16>}, {pipeline_mode = #tpu.pipeline_mode<synchronous>, transform_indices = @transform_1, window_bounds = array<i64: 32, 16>}, {pipeline_mode = #tpu.pipeline_mode<synchronous>, transform_indices = @transform_2, window_bounds = array<i64: 32, 32>}, {pipeline_mode = #tpu.pipeline_mode<synchronous>, transform_indices = @transform_3, window_bounds = array<i64: 8, 32>}, {pipeline_mode = #tpu.pipeline_mode<synchronous>, transform_indices = @transform_4, window_bounds = array<i64: 200, 1>}, {transform_indices = @transform_5, window_bounds = array<i64: 16, 128>}]} {
    %c0 = arith.constant 0 : index
    %c0_0 = arith.constant 0 : index
    %0 = vector.load %arg2[%c0, %c0_0] : memref<32x16xf32, #tpu.memory_space<vmem>>, vector<32x16xf32>
    %c0_1 = arith.constant 0 : index
    %c0_2 = arith.constant 0 : index
    %1 = vector.load %arg3[%c0_1, %c0_2] : memref<32x32xf32, #tpu.memory_space<vmem>>, vector<32x32xf32>
    %c0_3 = arith.constant 0 : index
    %c0_4 = arith.constant 0 : index
    %2 = vector.load %arg4[%c0_3, %c0_4] : memref<8x32xf32, #tpu.memory_space<vmem>>, vector<8x32xf32>
    %c0_5 = arith.constant 0 : index
    %c0_6 = arith.constant 0 : index
    %3 = vector.load %arg5[%c0_5, %c0_6] : memref<200x1xf32, #tpu.memory_space<vmem>>, vector<200x1xf32>
    %4 = vector.extract_strided_slice %3 {offsets = [0, 0], sizes = [32, 1], strides = [1, 1]} : vector<200x1xf32> to vector<32x1xf32>
    %5 = vector.extract_strided_slice %3 {offsets = [32, 0], sizes = [32, 1], strides = [1, 1]} : vector<200x1xf32> to vector<32x1xf32>
    %6 = vector.extract_strided_slice %3 {offsets = [64, 0], sizes = [32, 1], strides = [1, 1]} : vector<200x1xf32> to vector<32x1xf32>
    %7 = vector.extract_strided_slice %3 {offsets = [96, 0], sizes = [32, 1], strides = [1, 1]} : vector<200x1xf32> to vector<32x1xf32>
    %8 = vector.extract_strided_slice %3 {offsets = [128, 0], sizes = [32, 1], strides = [1, 1]} : vector<200x1xf32> to vector<32x1xf32>
    %9 = vector.extract_strided_slice %3 {offsets = [160, 0], sizes = [32, 1], strides = [1, 1]} : vector<200x1xf32> to vector<32x1xf32>
    %10 = vector.extract_strided_slice %3 {offsets = [192, 0], sizes = [8, 1], strides = [1, 1]} : vector<200x1xf32> to vector<8x1xf32>
    %c0_i32 = arith.constant 0 : i32
    %c128_i32 = arith.constant 128 : i32
    %11 = arith.muli %c0_i32, %c128_i32 : i32
    %12 = tpu.assume_multiple %11, 128 : i32
    %13 = arith.index_cast %12 : i32 to index
    %c0_7 = arith.constant 0 : index
    %14 = vector.load %arg1[%13, %c0_7] : memref<128x16xf32, #tpu.memory_space<vmem>>, vector<128x16xf32>
    %cst = arith.constant dense<0.000000e+00> : vector<32x128xf32>
    %15 = tpu.matmul %0, %14, %cst {dimension_numbers = #tpu.dot_dimension_numbers<[1], [1], [0], [0], [0, 0, 1, 0], [], []>} : vector<32x16xf32>, vector<128x16xf32>, vector<32x128xf32> -> vector<32x128xf32>
    %16 = vector.broadcast %4 : vector<32x1xf32> to vector<32x128xf32>
    %17 = arith.addf %15, %16 : vector<32x128xf32>
    %cst_8 = arith.constant 0.00999999977 : f32
    %18 = vector.broadcast %cst_8 : f32 to vector<32x128xf32>
    %19 = arith.mulf %18, %17 : vector<32x128xf32>
    %20 = arith.maximumf %17, %19 : vector<32x128xf32>
    %cst_9 = arith.constant dense<0.000000e+00> : vector<128xf32>
    %21 = vector.multi_reduction <add>, %20, %cst_9 [0] : vector<32x128xf32> to vector<128xf32>
    %22 = vector.shape_cast %21 : vector<128xf32> to vector<1x128xf32>
    %cst_10 = arith.constant 3.200000e+01 : f32
    %23 = vector.broadcast %cst_10 : f32 to vector<1x128xf32>
    %24 = arith.divf %22, %23 : vector<1x128xf32>
    %25 = vector.broadcast %24 : vector<1x128xf32> to vector<32x128xf32>
    %26 = arith.subf %20, %25 : vector<32x128xf32>
    %27 = arith.mulf %26, %26 : vector<32x128xf32>
    %cst_11 = arith.constant dense<0.000000e+00> : vector<128xf32>
    %28 = vector.multi_reduction <add>, %27, %cst_11 [0] : vector<32x128xf32> to vector<128xf32>
    %29 = vector.shape_cast %28 : vector<128xf32> to vector<1x128xf32>
    %cst_12 = arith.constant 3.200000e+01 : f32
    %30 = vector.broadcast %cst_12 : f32 to vector<1x128xf32>
    %31 = arith.divf %29, %30 : vector<1x128xf32>
    %cst_13 = arith.constant 9.99999974E-6 : f32
    %32 = vector.broadcast %cst_13 : f32 to vector<1x128xf32>
    %33 = arith.addf %31, %32 : vector<1x128xf32>
    %34 = math.rsqrt %33 : vector<1x128xf32>
    %35 = vector.broadcast %34 : vector<1x128xf32> to vector<32x128xf32>
    %36 = arith.mulf %26, %35 : vector<32x128xf32>
    %37 = vector.broadcast %5 : vector<32x1xf32> to vector<32x128xf32>
    %38 = arith.mulf %36, %37 : vector<32x128xf32>
    %39 = vector.broadcast %6 : vector<32x1xf32> to vector<32x128xf32>
    %40 = arith.addf %38, %39 : vector<32x128xf32>
    %cst_14 = arith.constant dense<0.000000e+00> : vector<32x128xf32>
    %41 = tpu.matmul %1, %40, %cst_14 {dimension_numbers = #tpu.dot_dimension_numbers<[1], [0], [0], [1], [0, 0, 1, 1], [], []>} : vector<32x32xf32>, vector<32x128xf32>, vector<32x128xf32> -> vector<32x128xf32>
    %42 = vector.broadcast %7 : vector<32x1xf32> to vector<32x128xf32>
    %43 = arith.addf %41, %42 : vector<32x128xf32>
    %cst_15 = arith.constant 0.00999999977 : f32
    %44 = vector.broadcast %cst_15 : f32 to vector<32x128xf32>
    %45 = arith.mulf %44, %43 : vector<32x128xf32>
    %46 = arith.maximumf %43, %45 : vector<32x128xf32>
    %cst_16 = arith.constant dense<0.000000e+00> : vector<128xf32>
    %47 = vector.multi_reduction <add>, %46, %cst_16 [0] : vector<32x128xf32> to vector<128xf32>
    %48 = vector.shape_cast %47 : vector<128xf32> to vector<1x128xf32>
    %cst_17 = arith.constant 3.200000e+01 : f32
    %49 = vector.broadcast %cst_17 : f32 to vector<1x128xf32>
    %50 = arith.divf %48, %49 : vector<1x128xf32>
    %51 = vector.broadcast %50 : vector<1x128xf32> to vector<32x128xf32>
    %52 = arith.subf %46, %51 : vector<32x128xf32>
    %53 = arith.mulf %52, %52 : vector<32x128xf32>
    %cst_18 = arith.constant dense<0.000000e+00> : vector<128xf32>
    %54 = vector.multi_reduction <add>, %53, %cst_18 [0] : vector<32x128xf32> to vector<128xf32>
    %55 = vector.shape_cast %54 : vector<128xf32> to vector<1x128xf32>
    %cst_19 = arith.constant 3.200000e+01 : f32
    %56 = vector.broadcast %cst_19 : f32 to vector<1x128xf32>
    %57 = arith.divf %55, %56 : vector<1x128xf32>
    %cst_20 = arith.constant 9.99999974E-6 : f32
    %58 = vector.broadcast %cst_20 : f32 to vector<1x128xf32>
    %59 = arith.addf %57, %58 : vector<1x128xf32>
    %60 = math.rsqrt %59 : vector<1x128xf32>
    %61 = vector.broadcast %60 : vector<1x128xf32> to vector<32x128xf32>
    %62 = arith.mulf %52, %61 : vector<32x128xf32>
    %63 = vector.broadcast %8 : vector<32x1xf32> to vector<32x128xf32>
    %64 = arith.mulf %62, %63 : vector<32x128xf32>
    %65 = vector.broadcast %9 : vector<32x1xf32> to vector<32x128xf32>
    %66 = arith.addf %64, %65 : vector<32x128xf32>
    %cst_21 = arith.constant dense<0.000000e+00> : vector<8x128xf32>
    %67 = tpu.matmul %2, %66, %cst_21 {dimension_numbers = #tpu.dot_dimension_numbers<[1], [0], [0], [1], [0, 0, 1, 1], [], []>} : vector<8x32xf32>, vector<32x128xf32>, vector<8x128xf32> -> vector<8x128xf32>
    %68 = vector.broadcast %10 : vector<8x1xf32> to vector<8x128xf32>
    %69 = arith.addf %67, %68 : vector<8x128xf32>
    %cst_22 = arith.constant dense<0xFF800000> : vector<128xf32>
    %70 = vector.multi_reduction <maximumf>, %69, %cst_22 [0] : vector<8x128xf32> to vector<128xf32>
    %71 = vector.shape_cast %70 : vector<128xf32> to vector<1x128xf32>
    %72 = vector.broadcast %71 : vector<1x128xf32> to vector<8x128xf32>
    %73 = arith.subf %69, %72 : vector<8x128xf32>
    %74 = math.exp %73 : vector<8x128xf32>
    %cst_23 = arith.constant dense<0.000000e+00> : vector<128xf32>
    %75 = vector.multi_reduction <add>, %74, %cst_23 [0] : vector<8x128xf32> to vector<128xf32>
    %76 = vector.shape_cast %75 : vector<128xf32> to vector<1x128xf32>
    %77 = math.log %76 : vector<1x128xf32>
    %c0_24 = arith.constant 0 : index
    %78 = arith.index_cast %12 : i32 to index
    %79 = vector.load %arg6[%c0_24, %78] : memref<16x128xf32, #tpu.memory_space<vmem>>, vector<8x128xf32>
    tpu.vector_store %arg6[%c0_24, %78], %69 {strides = array<i32>} : memref<16x128xf32, #tpu.memory_space<vmem>>, vector<8x128xf32>,
    %80 = vector.broadcast %77 : vector<1x128xf32> to vector<8x128xf32>
    %81 = arith.subf %73, %80 : vector<8x128xf32>
    %c8 = arith.constant 8 : index
    %82 = arith.index_cast %12 : i32 to index
    %83 = vector.load %arg6[%c8, %82] : memref<16x128xf32, #tpu.memory_space<vmem>>, vector<8x128xf32>
    tpu.vector_store %arg6[%c8, %82], %81 {strides = array<i32>} : memref<16x128xf32, #tpu.memory_space<vmem>>, vector<8x128xf32>,
    %c1_i32 = arith.constant 1 : i32
    return
  }
  func.func @transform_0(%arg0: i32) -> (i32, i32) {
    %c0_i32 = arith.constant 0 : i32
    %c0_i32_0 = arith.constant 0 : i32
    return %arg0, %c0_i32 : i32, i32
  }
  func.func @transform_1(%arg0: i32) -> (i32, i32) {
    %c0_i32 = arith.constant 0 : i32
    %c0_i32_0 = arith.constant 0 : i32
    %c0_i32_1 = arith.constant 0 : i32
    return %c0_i32, %c0_i32_0 : i32, i32
  }
  func.func @transform_2(%arg0: i32) -> (i32, i32) {
    %c0_i32 = arith.constant 0 : i32
    %c0_i32_0 = arith.constant 0 : i32
    %c0_i32_1 = arith.constant 0 : i32
    return %c0_i32, %c0_i32_0 : i32, i32
  }
  func.func @transform_3(%arg0: i32) -> (i32, i32) {
    %c0_i32 = arith.constant 0 : i32
    %c0_i32_0 = arith.constant 0 : i32
    %c0_i32_1 = arith.constant 0 : i32
    return %c0_i32, %c0_i32_0 : i32, i32
  }
  func.func @transform_4(%arg0: i32) -> (i32, i32) {
    %c0_i32 = arith.constant 0 : i32
    %c0_i32_0 = arith.constant 0 : i32
    %c0_i32_1 = arith.constant 0 : i32
    return %c0_i32, %c0_i32_0 : i32, i32
  }
  func.func @transform_5(%arg0: i32) -> (i32, i32) {
    %c0_i32 = arith.constant 0 : i32
    %c0_i32_0 = arith.constant 0 : i32
    return %c0_i32, %arg0 : i32, i32
  }
}

</mosaic_0001>

<llo_original>
// kernel: tpu_custom_call.1
$region0: #{tpu_custom_call.1}
  #allocation0 [shape = 'u32[]', space=smem, size = 0x4, offset = 0x4, fixed_abs, tag = 'smem constant byte address 0x4 - core index']
  #allocation1 [shape = 'u32[144,128]{1,0:T(1,128)}', space=vmem, size = 0x12000, scoped, tag = 'internal scratch']
  %s0 = inlined_call_operand.vmem [shape: f32[128,16], index: 0, kind: input, shape index: {}]
  %s1 = inlined_call_operand.vmem [shape: f32[32,16], index: 1, kind: input, shape index: {}]
  %s2 = inlined_call_operand.vmem [shape: f32[32,32], index: 2, kind: input, shape index: {}]
  %s3 = inlined_call_operand.vmem [shape: f32[8,32], index: 3, kind: input, shape index: {}]
  %s4 = inlined_call_operand.vmem [shape: f32[200,1], index: 4, kind: input, shape index: {}]
  %s5 = inlined_call_operand.hbm [shape: f32[16,128], index: 5, kind: output, shape index: {}]
  %s6 = sld [smem:[#allocation0]]
  $region30: #{tpu_custom_call.1} parent=0
    _
  %s8 = ssub.s32 1, %s6
  %s9 = scalar_select 0, %s8, %s6
  $region1: #{tpu_custom_call.1} parent=0
    #allocation2 [shape = 'u8[8192]{0}', space=vmem, size = 0x2000, scoped, tag = 'output window, operand 0, single buffered']
    #allocation3 [shape = 's32[1]{0}', space=sflag, size = 0x4, scoped, tag = 'scoped memory for tpu_custom_call.1']
    %10 = vsyncpa [#allocation3], 0
    // Predicated region
    $region2: #{tpu_custom_call.1} parent=1 // pred_check
      _
    $region3: #{tpu_custom_call.1} parent=1 // pred_check_branch
      %12 = sbr.rel (0) target = $region5
    $region4: #{tpu_custom_call.1} parent=1 // pred_region
      _
    $region5: #{tpu_custom_call.1} parent=1 // pred_fallthru
      _
    // Predicated region
    $region6: #{tpu_custom_call.1} parent=1 // pred_check
      _
    $region7: #{tpu_custom_call.1} parent=1 // pred_check_branch
      %14 = sbr.rel (0) target = $region9
    $region8: #{tpu_custom_call.1} parent=1 // pred_region
      _
    $region9: #{tpu_custom_call.1} parent=1 // pred_fallthru
      _
    // Predicated region
    $region10: #{tpu_custom_call.1} parent=1 // pred_check
      _
    $region11: #{tpu_custom_call.1} parent=1 // pred_check_branch
      %16 = sbr.rel (0) target = $region13
    $region12: #{tpu_custom_call.1} parent=1 // pred_region
      _
    $region13: #{tpu_custom_call.1} parent=1 // pred_fallthru
      _
    // Predicated region
    $region14: #{tpu_custom_call.1} parent=1 // pred_check
      _
    $region15: #{tpu_custom_call.1} parent=1 // pred_check_branch
      %18 = sbr.rel (0) target = $region17
    $region16: #{tpu_custom_call.1} parent=1 // pred_region
      _
    $region17: #{tpu_custom_call.1} parent=1 // pred_fallthru
      _
    // Predicated region
    $region18: #{tpu_custom_call.1} parent=1 // pred_check
      _
    $region19: #{tpu_custom_call.1} parent=1 // pred_check_branch
      %20 = sbr.rel (0) target = $region21
    $region20: #{tpu_custom_call.1} parent=1 // pred_region
      _
    $region21: #{tpu_custom_call.1} parent=1 // pred_fallthru
      _
    %v21 = vld [vmem:[%s1] sm:$0xff]
    %v22 = vld [vmem:[%s1 + $0x8] sm:$0xff]
    %v23 = vld [vmem:[%s1 + $0x10] sm:$0xff]
    %v24 = vld [vmem:[%s1 + $0x18] sm:$0xff]
    %v25 = vld [vmem:[%s2] sm:$0xff]
    %v26 = vld [vmem:[%s2 + $0x8] sm:$0xff]
    %v27 = vld [vmem:[%s2 + $0x10] sm:$0xff]
    %v28 = vld [vmem:[%s2 + $0x18] sm:$0xff]
    %v29 = vld [vmem:[%s3] sm:$0xff]
    %v30 = vld [vmem:[%s4] sm:$0xff]
    %v31 = vld [vmem:[%s4 + $0x8] sm:$0xff]
    %v32 = vld [vmem:[%s4 + $0x10] sm:$0xff]
    %v33 = vld [vmem:[%s4 + $0x18] sm:$0xff]
    %v34 = vld [vmem:[%s4 + $0x20] sm:$0xff]
    %v35 = vld [vmem:[%s4 + $0x28] sm:$0xff]
    %v36 = vld [vmem:[%s4 + $0x30] sm:$0xff]
    %v37 = vld [vmem:[%s4 + $0x38] sm:$0xff]
    %v38 = vld [vmem:[%s4 + $0x40] sm:$0xff]
    %v39 = vld [vmem:[%s4 + $0x48] sm:$0xff]
    %v40 = vld [vmem:[%s4 + $0x50] sm:$0xff]
    %v41 = vld [vmem:[%s4 + $0x58] sm:$0xff]
    %v42 = vld [vmem:[%s4 + $0x60] sm:$0xff]
    %v43 = vld [vmem:[%s4 + $0x68] sm:$0xff]
    %v44 = vld [vmem:[%s4 + $0x70] sm:$0xff]
    %v45 = vld [vmem:[%s4 + $0x78] sm:$0xff]
    %v46 = vld [vmem:[%s4 + $0x80] sm:$0xff]
    %v47 = vld [vmem:[%s4 + $0x88] sm:$0xff]
    %v48 = vld [vmem:[%s4 + $0x90] sm:$0xff]
    %v49 = vld [vmem:[%s4 + $0x98] sm:$0xff]
    %v50 = vld [vmem:[%s4 + $0xa0] sm:$0xff]
    %v51 = vld [vmem:[%s4 + $0xa8] sm:$0xff]
    %v52 = vld [vmem:[%s4 + $0xb0] sm:$0xff]
    %v53 = vld [vmem:[%s4 + $0xb8] sm:$0xff]
    %v54 = vld [vmem:[%s4 + $0xc0] sm:$0xff]
    %v55 = vld [vmem:[%s0] sm:$0xff]
    %v56 = vld [vmem:[%s0 + $0x8] sm:$0xff]
    %v57 = vld [vmem:[%s0 + $0x10] sm:$0xff]
    %v58 = vld [vmem:[%s0 + $0x18] sm:$0xff]
    %v59 = vld [vmem:[%s0 + $0x20] sm:$0xff]
    %v60 = vld [vmem:[%s0 + $0x28] sm:$0xff]
    %v61 = vld [vmem:[%s0 + $0x30] sm:$0xff]
    %v62 = vld [vmem:[%s0 + $0x38] sm:$0xff]
    %v63 = vld [vmem:[%s0 + $0x40] sm:$0xff]
    %v64 = vld [vmem:[%s0 + $0x48] sm:$0xff]
    %v65 = vld [vmem:[%s0 + $0x50] sm:$0xff]
    %v66 = vld [vmem:[%s0 + $0x58] sm:$0xff]
    %v67 = vld [vmem:[%s0 + $0x60] sm:$0xff]
    %v68 = vld [vmem:[%s0 + $0x68] sm:$0xff]
    %v69 = vld [vmem:[%s0 + $0x70] sm:$0xff]
    %v70 = vld [vmem:[%s0 + $0x78] sm:$0xff]
    %72 = vset.pattern.permute.xlu0 0
    %73 = vperm.xlu0 %72, %v30
    %v74 = vpop.permute.xlu0 %73
    %77 = vset.pattern.permute.xlu0 0
    %78 = vperm.xlu0 %77, %v31
    %v79 = vpop.permute.xlu0 %78
    %82 = vset.pattern.permute.xlu0 0
    %83 = vperm.xlu0 %82, %v32
    %v84 = vpop.permute.xlu0 %83
    %87 = vset.pattern.permute.xlu0 0
    %88 = vperm.xlu0 %87, %v33
    %v89 = vpop.permute.xlu0 %88
    %vm91 = vcmask 130048
    %v93 = vsel %vm91, %v21, 0
    %v96 = vsel %vm91, %v22, 0
    %v99 = vsel %vm91, %v23, 0
    %v102 = vsel %vm91, %v24, 0
    %v105 = vsel %vm91, %v55, 0
    %v108 = vsel %vm91, %v56, 0
    %v111 = vsel %vm91, %v57, 0
    %v114 = vsel %vm91, %v58, 0
    %v117 = vsel %vm91, %v59, 0
    %v120 = vsel %vm91, %v60, 0
    %v123 = vsel %vm91, %v61, 0
    %v126 = vsel %vm91, %v62, 0
    %v129 = vsel %vm91, %v63, 0
    %v132 = vsel %vm91, %v64, 0
    %v135 = vsel %vm91, %v65, 0
    %v138 = vsel %vm91, %v66, 0
    %v141 = vsel %vm91, %v67, 0
    %v144 = vsel %vm91, %v68, 0
    %v147 = vsel %vm91, %v69, 0
    %v150 = vsel %vm91, %v70, 0
    %152 = vmatprep.subr.mxu0 0.0
    %153 = vmatpush1.xpose.msra.mxu0 %v105
    %154 = vmatprep.subr.mxu0 0.0
    %155 = vmatpush1.xpose.msra.mxu0 %v108
    %156 = vmatprep.subr.mxu0 0.0
    %157 = vmatpush1.xpose.msra.mxu0 %v111
    %158 = vmatprep.subr.mxu0 0.0
    %159 = vmatpush1.xpose.msra.mxu0 %v114
    %160 = vmatprep.subr.mxu0 0.0
    %161 = vmatpush1.xpose.msra.mxu0 %v117
    %162 = vmatprep.subr.mxu0 0.0
    %163 = vmatpush1.xpose.msra.mxu0 %v120
    %164 = vmatprep.subr.mxu0 0.0
    %165 = vmatpush1.xpose.msra.mxu0 %v123
    %166 = vmatprep.subr.mxu0 0.0
    %167 = vmatpush1.xpose.msra.mxu0 %v126
    %168 = vmatprep.subr.mxu0 0.0
    %169 = vmatpush1.xpose.msra.mxu0 %v129
    %170 = vmatprep.subr.mxu0 0.0
    %171 = vmatpush1.xpose.msra.mxu0 %v132
    %172 = vmatprep.subr.mxu0 0.0
    %173 = vmatpush1.xpose.msra.mxu0 %v135
    %174 = vmatprep.subr.mxu0 0.0
    %175 = vmatpush1.xpose.msra.mxu0 %v138
    %176 = vmatprep.subr.mxu0 0.0
    %177 = vmatpush1.xpose.msra.mxu0 %v141
    %178 = vmatprep.subr.mxu0 0.0
    %179 = vmatpush1.xpose.msra.mxu0 %v144
    %180 = vmatprep.subr.mxu0 0.0
    %181 = vmatpush1.xpose.msra.mxu0 %v147
    %182 = vmatprep.subr.mxu0 0.0
    %183 = vmatpush1.xpose.msra.mxu0 %v150
    %184 = vmatprep.subr.mxu0 0.0
    %185 = vmatpush1.xpose.msra.mxu0 0.0
    %186 = vmatprep.subr.mxu0 0.0
    %187 = vmatpush1.xpose.msra.mxu0 0.0
    %188 = vmatprep.subr.mxu0 0.0
    %189 = vmatpush1.xpose.msra.mxu0 0.0
    %190 = vmatprep.subr.mxu0 0.0
    %191 = vmatpush1.xpose.msra.mxu0 0.0
    %192 = vmatprep.subr.mxu0 0.0
    %193 = vmatpush1.xpose.msra.mxu0 0.0
    %194 = vmatprep.subr.mxu0 0.0
    %195 = vmatpush1.xpose.msra.mxu0 0.0
    %196 = vmatprep.subr.mxu0 0.0
    %197 = vmatpush1.xpose.msra.mxu0 0.0
    %198 = vmatprep.subr.mxu0 0.0
    %199 = vmatpush1.xpose.msra.mxu0 0.0
    %200 = vmatprep.subr.mxu0 0.0
    %201 = vmatpush1.xpose.msra.mxu0 0.0
    %202 = vmatprep.subr.mxu0 0.0
    %203 = vmatpush1.xpose.msra.mxu0 0.0
    %204 = vmatprep.subr.mxu0 0.0
    %205 = vmatpush1.xpose.msra.mxu0 0.0
    %206 = vmatprep.subr.mxu0 0.0
    %207 = vmatpush1.xpose.msra.mxu0 0.0
    %208 = vmatprep.subr.mxu0 0.0
    %209 = vmatpush1.xpose.msra.mxu0 0.0
    %210 = vmatprep.subr.mxu0 0.0
    %211 = vmatpush1.xpose.msra.mxu0 0.0
    %212 = vmatprep.subr.mxu0 0.0
    %213 = vmatpush1.xpose.msra.mxu0 0.0
    %214 = vmatprep.subr.mxu0 0.0
    %215 = vmatpush1.xpose.msra.mxu0 0.0
    %216 = vmatprep.mubr.f32.mxu0 0.0
    %217 = vmatmul.mubr.f32.gmra.mrb[0].mxu0 %v93
    %v218 = vpop.f32.mrb[0].mxu0
    %v219 = vadd.f32 %v74, %v218
    %v220 = vpop.f32.mrb[0].mxu0
    %221 = vmatprep.mubr.f32.mxu0 0.0
    %222 = vmatmul.mubr.f32.gmra.mrb[0].mxu0 %v96
    %v223 = vpop.f32.mrb[0].mxu0
    %v224 = vadd.f32 %v79, %v223
    %v225 = vpop.f32.mrb[0].mxu0
    %226 = vmatprep.mubr.f32.mxu0 0.0
    %227 = vmatmul.mubr.f32.gmra.mrb[0].mxu0 %v99
    %v228 = vpop.f32.mrb[0].mxu0
    %v229 = vadd.f32 %v84, %v228
    %v230 = vpop.f32.mrb[0].mxu0
    %231 = vmatprep.mubr.f32.mxu0 0.0
    %232 = vmatmul.mubr.f32.gmra.mrb[0].mxu0 %v102
    %v233 = vpop.f32.mrb[0].mxu0
    %v234 = vadd.f32 %v89, %v233
    %v235 = vpop.f32.mrb[0].mxu0
    %236 = vdwg.mxu0
    %v237 = vmul.f32 %v219, 0.01
    %v238 = vmul.f32 %v224, 0.01
    %v239 = vmul.f32 %v229, 0.01
    %v240 = vmul.f32 %v234, 0.01
    %v241 = vmax.f32 %v219, %v237
    %v242 = vmax.f32 %v224, %v238
    %v243 = vmax.f32 %v229, %v239
    %v244 = vmax.f32 %v234, %v240
    %v245 = vadd.f32 %v241, %v242
    %v246 = vadd.f32 %v245, %v243
    %v247 = vadd.f32 %v246, %v244
    %v248 = vrot.slane %v247, 4
    %v249 = vadd.f32 %v247, %v248
    %v250 = vrot.slane %v249, 2
    %v251 = vadd.f32 %v249, %v250
    %v252 = vrot.slane %v251, 1
    %v253 = vadd.f32 %v251, %v252
    %v254 = vrcp.pop 32.0
    %v255 = vmul.f32 %v253, %v254
    %v256 = vsub.f32 %v241, %v255
    %v257 = vsub.f32 %v242, %v255
    %v258 = vsub.f32 %v243, %v255
    %v259 = vsub.f32 %v244, %v255
    %v260 = vmul.f32 %v256, %v256
    %v261 = vmul.f32 %v257, %v257
    %v262 = vmul.f32 %v258, %v258
    %v263 = vmul.f32 %v259, %v259
    %v264 = vadd.f32 %v260, %v261
    %v265 = vadd.f32 %v264, %v262
    %v266 = vadd.f32 %v265, %v263
    %v267 = vrot.slane %v266, 4
    %v268 = vadd.f32 %v266, %v267
    %v269 = vrot.slane %v268, 2
    %v270 = vadd.f32 %v268, %v269
    %v271 = vrot.slane %v270, 1
    %v272 = vadd.f32 %v270, %v271
    %v273 = vmul.f32 %v272, %v254
    %v274 = vadd.f32 %v273, 1e-05
    %v275 = vrsqrt.pop %v274
    %v276 = vmul.f32 %v256, %v275
    %v277 = vmul.f32 %v257, %v275
    %v278 = vmul.f32 %v258, %v275
    %v279 = vmul.f32 %v259, %v275
    %281 = vset.pattern.permute.xlu0 0
    %282 = vperm.xlu0 %281, %v34
    %v283 = vpop.permute.xlu0 %282
    %286 = vset.pattern.permute.xlu0 0
    %287 = vperm.xlu0 %286, %v35
    %v288 = vpop.permute.xlu0 %287
    %291 = vset.pattern.permute.xlu0 0
    %292 = vperm.xlu0 %291, %v36
    %v293 = vpop.permute.xlu0 %292
    %296 = vset.pattern.permute.xlu0 0
    %297 = vperm.xlu0 %296, %v37
    %v298 = vpop.permute.xlu0 %297
    %v300 = vmul.f32 %v276, %v283
    %v301 = vmul.f32 %v277, %v288
    %v302 = vmul.f32 %v278, %v293
    %v303 = vmul.f32 %v279, %v298
    %305 = vset.pattern.permute.xlu0 0
    %306 = vperm.xlu0 %305, %v38
    %v307 = vpop.permute.xlu0 %306
    %310 = vset.pattern.permute.xlu0 0
    %311 = vperm.xlu0 %310, %v39
    %v312 = vpop.permute.xlu0 %311
    %315 = vset.pattern.permute.xlu0 0
    %316 = vperm.xlu0 %315, %v40
    %v317 = vpop.permute.xlu0 %316
    %320 = vset.pattern.permute.xlu0 0
    %321 = vperm.xlu0 %320, %v41
    %v322 = vpop.permute.xlu0 %321
    %v324 = vadd.f32 %v300, %v307
    %v325 = vadd.f32 %v301, %v312
    %v326 = vadd.f32 %v302, %v317
    %v327 = vadd.f32 %v303, %v322
    %329 = vset.pattern.permute.xlu0 0
    %330 = vperm.xlu0 %329, %v42
    %v331 = vpop.permute.xlu0 %330
    %334 = vset.pattern.permute.xlu0 0
    %335 = vperm.xlu0 %334, %v43
    %v336 = vpop.permute.xlu0 %335
    %339 = vset.pattern.permute.xlu0 0
    %340 = vperm.xlu0 %339, %v44
    %v341 = vpop.permute.xlu0 %340
    %344 = vset.pattern.permute.xlu0 0
    %345 = vperm.xlu0 %344, %v45
    %v346 = vpop.permute.xlu0 %345
    %vm348 = vcmask 261120
    %v350 = vsel %vm348, %v25, 0
    %v353 = vsel %vm348, %v26, 0
    %v356 = vsel %vm348, %v27, 0
    %v359 = vsel %vm348, %v28, 0
    %361 = vmatprep.subr.mxu0 0.0
    %362 = vmatpush1.msra.mxu0 %v324
    %363 = vmatprep.subr.mxu0 0.0
    %364 = vmatpush1.msra.mxu0 %v325
    %365 = vmatprep.subr.mxu0 0.0
    %366 = vmatpush1.msra.mxu0 %v326
    %367 = vmatprep.subr.mxu0 0.0
    %368 = vmatpush1.msra.mxu0 %v327
    %369 = vmatprep.subr.mxu0 0.0
    %370 = vmatpush1.msra.mxu0 0.0
    %371 = vmatprep.subr.mxu0 0.0
    %372 = vmatpush1.msra.mxu0 0.0
    %373 = vmatprep.subr.mxu0 0.0
    %374 = vmatpush1.msra.mxu0 0.0
    %375 = vmatprep.subr.mxu0 0.0
    %376 = vmatpush1.msra.mxu0 0.0
    %377 = vmatprep.subr.mxu0 0.0
    %378 = vmatpush1.msra.mxu0 0.0
    %379 = vmatprep.subr.mxu0 0.0
    %380 = vmatpush1.msra.mxu0 0.0
    %381 = vmatprep.subr.mxu0 0.0
    %382 = vmatpush1.msra.mxu0 0.0
    %383 = vmatprep.subr.mxu0 0.0
    %384 = vmatpush1.msra.mxu0 0.0
    %385 = vmatprep.subr.mxu0 0.0
    %386 = vmatpush1.msra.mxu0 0.0
    %387 = vmatprep.subr.mxu0 0.0
    %388 = vmatpush1.msra.mxu0 0.0
    %389 = vmatprep.subr.mxu0 0.0
    %390 = vmatpush1.msra.mxu0 0.0
    %391 = vmatprep.subr.mxu0 0.0
    %392 = vmatpush1.msra.mxu0 0.0
    %393 = vmatprep.subr.mxu0 0.0
    %394 = vmatpush1.msra.mxu0 0.0
    %395 = vmatprep.subr.mxu0 0.0
    %396 = vmatpush1.msra.mxu0 0.0
    %397 = vmatprep.subr.mxu0 0.0
    %398 = vmatpush1.msra.mxu0 0.0
    %399 = vmatprep.subr.mxu0 0.0
    %400 = vmatpush1.msra.mxu0 0.0
    %401 = vmatprep.subr.mxu0 0.0
    %402 = vmatpush1.msra.mxu0 0.0
    %403 = vmatprep.subr.mxu0 0.0
    %404 = vmatpush1.msra.mxu0 0.0
    %405 = vmatprep.subr.mxu0 0.0
    %406 = vmatpush1.msra.mxu0 0.0
    %407 = vmatprep.subr.mxu0 0.0
    %408 = vmatpush1.msra.mxu0 0.0
    %409 = vmatprep.subr.mxu0 0.0
    %410 = vmatpush1.msra.mxu0 0.0
    %411 = vmatprep.subr.mxu0 0.0
    %412 = vmatpush1.msra.mxu0 0.0
    %413 = vmatprep.subr.mxu0 0.0
    %414 = vmatpush1.msra.mxu0 0.0
    %415 = vmatprep.subr.mxu0 0.0
    %416 = vmatpush1.msra.mxu0 0.0
    %417 = vmatprep.subr.mxu0 0.0
    %418 = vmatpush1.msra.mxu0 0.0
    %419 = vmatprep.subr.mxu0 0.0
    %420 = vmatpush1.msra.mxu0 0.0
    %421 = vmatprep.subr.mxu0 0.0
    %422 = vmatpush1.msra.mxu0 0.0
    %423 = vmatprep.subr.mxu0 0.0
    %424 = vmatpush1.msra.mxu0 0.0
    %425 = vmatprep.mubr.f32.mxu0 0.0
    %426 = vmatmul.mubr.f32.gmra.mrb[0].mxu0 %v350
    %v427 = vpop.f32.mrb[0].mxu0
    %v428 = vadd.f32 %v331, %v427
    %v429 = vpop.f32.mrb[0].mxu0
    %430 = vmatprep.mubr.f32.mxu0 0.0
    %431 = vmatmul.mubr.f32.gmra.mrb[0].mxu0 %v353
    %v432 = vpop.f32.mrb[0].mxu0
    %v433 = vadd.f32 %v336, %v432
    %v434 = vpop.f32.mrb[0].mxu0
    %435 = vmatprep.mubr.f32.mxu0 0.0
    %436 = vmatmul.mubr.f32.gmra.mrb[0].mxu0 %v356
    %v437 = vpop.f32.mrb[0].mxu0
    %v438 = vadd.f32 %v341, %v437
    %v439 = vpop.f32.mrb[0].mxu0
    %440 = vmatprep.mubr.f32.mxu0 0.0
    %441 = vmatmul.mubr.f32.gmra.mrb[0].mxu0 %v359
    %v442 = vpop.f32.mrb[0].mxu0
    %v443 = vadd.f32 %v346, %v442
    %v444 = vpop.f32.mrb[0].mxu0
    %445 = vdwg.mxu0
    %v446 = vmul.f32 %v428, 0.01
    %v447 = vmul.f32 %v433, 0.01
    %v448 = vmul.f32 %v438, 0.01
    %v449 = vmul.f32 %v443, 0.01
    %v450 = vmax.f32 %v428, %v446
    %v451 = vmax.f32 %v433, %v447
    %v452 = vmax.f32 %v438, %v448
    %v453 = vmax.f32 %v443, %v449
    %v454 = vadd.f32 %v450, %v451
    %v455 = vadd.f32 %v454, %v452
    %v456 = vadd.f32 %v455, %v453
    %v457 = vrot.slane %v456, 4
    %v458 = vadd.f32 %v456, %v457
    %v459 = vrot.slane %v458, 2
    %v460 = vadd.f32 %v458, %v459
    %v461 = vrot.slane %v460, 1
    %v462 = vadd.f32 %v460, %v461
    %v463 = vmul.f32 %v462, %v254
    %v464 = vsub.f32 %v450, %v463
    %v465 = vsub.f32 %v451, %v463
    %v466 = vsub.f32 %v452, %v463
    %v467 = vsub.f32 %v453, %v463
    %v468 = vmul.f32 %v464, %v464
    %v469 = vmul.f32 %v465, %v465
    %v470 = vmul.f32 %v466, %v466
    %v471 = vmul.f32 %v467, %v467
    %v472 = vadd.f32 %v468, %v469
    %v473 = vadd.f32 %v472, %v470
    %v474 = vadd.f32 %v473, %v471
    %v475 = vrot.slane %v474, 4
    %v476 = vadd.f32 %v474, %v475
    %v477 = vrot.slane %v476, 2
    %v478 = vadd.f32 %v476, %v477
    %v479 = vrot.slane %v478, 1
    %v480 = vadd.f32 %v478, %v479
    %v481 = vmul.f32 %v480, %v254
    %v482 = vadd.f32 %v481, 1e-05
    %v483 = vrsqrt.pop %v482
    %v484 = vmul.f32 %v464, %v483
    %v485 = vmul.f32 %v465, %v483
    %v486 = vmul.f32 %v466, %v483
    %v487 = vmul.f32 %v467, %v483
    %489 = vset.pattern.permute.xlu0 0
    %490 = vperm.xlu0 %489, %v46
    %v491 = vpop.permute.xlu0 %490
    %494 = vset.pattern.permute.xlu0 0
    %495 = vperm.xlu0 %494, %v47
    %v496 = vpop.permute.xlu0 %495
    %499 = vset.pattern.permute.xlu0 0
    %500 = vperm.xlu0 %499, %v48
    %v501 = vpop.permute.xlu0 %500
    %504 = vset.pattern.permute.xlu0 0
    %505 = vperm.xlu0 %504, %v49
    %v506 = vpop.permute.xlu0 %505
    %v508 = vmul.f32 %v484, %v491
    %v509 = vmul.f32 %v485, %v496
    %v510 = vmul.f32 %v486, %v501
    %v511 = vmul.f32 %v487, %v506
    %513 = vset.pattern.permute.xlu0 0
    %514 = vperm.xlu0 %513, %v50
    %v515 = vpop.permute.xlu0 %514
    %518 = vset.pattern.permute.xlu0 0
    %519 = vperm.xlu0 %518, %v51
    %v520 = vpop.permute.xlu0 %519
    %523 = vset.pattern.permute.xlu0 0
    %524 = vperm.xlu0 %523, %v52
    %v525 = vpop.permute.xlu0 %524
    %528 = vset.pattern.permute.xlu0 0
    %529 = vperm.xlu0 %528, %v53
    %v530 = vpop.permute.xlu0 %529
    %v532 = vadd.f32 %v508, %v515
    %v533 = vadd.f32 %v509, %v520
    %v534 = vadd.f32 %v510, %v525
    %v535 = vadd.f32 %v511, %v530
    %537 = vset.pattern.permute.xlu0 0
    %538 = vperm.xlu0 %537, %v54
    %v539 = vpop.permute.xlu0 %538
    %v542 = vsel %vm348, %v29, 0
    %544 = vmatprep.subr.mxu0 0.0
    %545 = vmatpush1.msra.mxu0 %v532
    %546 = vmatprep.subr.mxu0 0.0
    %547 = vmatpush1.msra.mxu0 %v533
    %548 = vmatprep.subr.mxu0 0.0
    %549 = vmatpush1.msra.mxu0 %v534
    %550 = vmatprep.subr.mxu0 0.0
    %551 = vmatpush1.msra.mxu0 %v535
    %552 = vmatprep.subr.mxu0 0.0
    %553 = vmatpush1.msra.mxu0 0.0
    %554 = vmatprep.subr.mxu0 0.0
    %555 = vmatpush1.msra.mxu0 0.0
    %556 = vmatprep.subr.mxu0 0.0
    %557 = vmatpush1.msra.mxu0 0.0
    %558 = vmatprep.subr.mxu0 0.0
    %559 = vmatpush1.msra.mxu0 0.0
    %560 = vmatprep.subr.mxu0 0.0
    %561 = vmatpush1.msra.mxu0 0.0
    %562 = vmatprep.subr.mxu0 0.0
    %563 = vmatpush1.msra.mxu0 0.0
    %564 = vmatprep.subr.mxu0 0.0
    %565 = vmatpush1.msra.mxu0 0.0
    %566 = vmatprep.subr.mxu0 0.0
    %567 = vmatpush1.msra.mxu0 0.0
    %568 = vmatprep.subr.mxu0 0.0
    %569 = vmatpush1.msra.mxu0 0.0
    %570 = vmatprep.subr.mxu0 0.0
    %571 = vmatpush1.msra.mxu0 0.0
    %572 = vmatprep.subr.mxu0 0.0
    %573 = vmatpush1.msra.mxu0 0.0
    %574 = vmatprep.subr.mxu0 0.0
    %575 = vmatpush1.msra.mxu0 0.0
    %576 = vmatprep.subr.mxu0 0.0
    %577 = vmatpush1.msra.mxu0 0.0
    %578 = vmatprep.subr.mxu0 0.0
    %579 = vmatpush1.msra.mxu0 0.0
    %580 = vmatprep.subr.mxu0 0.0
    %581 = vmatpush1.msra.mxu0 0.0
    %582 = vmatprep.subr.mxu0 0.0
    %583 = vmatpush1.msra.mxu0 0.0
    %584 = vmatprep.subr.mxu0 0.0
    %585 = vmatpush1.msra.mxu0 0.0
    %586 = vmatprep.subr.mxu0 0.0
    %587 = vmatpush1.msra.mxu0 0.0
    %588 = vmatprep.subr.mxu0 0.0
    %589 = vmatpush1.msra.mxu0 0.0
    %590 = vmatprep.subr.mxu0 0.0
    %591 = vmatpush1.msra.mxu0 0.0
    %592 = vmatprep.subr.mxu0 0.0
    %593 = vmatpush1.msra.mxu0 0.0
    %594 = vmatprep.subr.mxu0 0.0
    %595 = vmatpush1.msra.mxu0 0.0
    %596 = vmatprep.subr.mxu0 0.0
    %597 = vmatpush1.msra.mxu0 0.0
    %598 = vmatprep.subr.mxu0 0.0
    %599 = vmatpush1.msra.mxu0 0.0
    %600 = vmatprep.subr.mxu0 0.0
    %601 = vmatpush1.msra.mxu0 0.0
    %602 = vmatprep.subr.mxu0 0.0
    %603 = vmatpush1.msra.mxu0 0.0
    %604 = vmatprep.subr.mxu0 0.0
    %605 = vmatpush1.msra.mxu0 0.0
    %606 = vmatprep.subr.mxu0 0.0
    %607 = vmatpush1.msra.mxu0 0.0
    %608 = vmatprep.mubr.f32.mxu0 0.0
    %609 = vmatmul.mubr.f32.gmra.mrb[0].mxu0 %v542
    %v610 = vpop.f32.mrb[0].mxu0
    %v611 = vadd.f32 %v539, %v610
    %v612 = vpop.f32.mrb[0].mxu0
    %613 = vdwg.mxu0
    %v614 = vrot.slane %v611, 4
    %v615 = vmax.f32 %v611, %v614
    %v616 = vrot.slane %v615, 2
    %v617 = vmax.f32 %v615, %v616
    %v618 = vrot.slane %v617, 1
    %v619 = vmax.f32 %v617, %v618
    %v620 = vsub.f32 %v611, %v619
    %v621 = vmul.f32 %v620, 1.442695
    %v622 = vpow.pop %v621
    %v623 = vrot.slane %v622, 4
    %v624 = vadd.f32 %v622, %v623
    %v625 = vrot.slane %v624, 2
    %v626 = vadd.f32 %v624, %v625
    %v627 = vrot.slane %v626, 1
    %v628 = vadd.f32 %v626, %v627
    %v629 = vlog2.pop %v628
    %v630 = vmul.f32 %v629, 0.6931472
    %631 = vst [vmem:[#allocation2] sm:$0xff] %v611
    %v632 = vsub.f32 %v620, %v630
    %633 = vst [vmem:[#allocation2 + $0x8] sm:$0xff] %v632
    // Predicated region
    $region22: #{tpu_custom_call.1} parent=1 // pred_check
      _
    $region23: #{tpu_custom_call.1} parent=1 // pred_check_branch
      %635 = sbr.rel (0) target = $region25
    $region24: #{tpu_custom_call.1} parent=1 // pred_region
      %s637 = ssub.s32 256, 256
      %638 = vsyncadd [#allocation3], %s637
      %s639 = sshll.u32 [#allocation2], 4
      %s640 = int_to_ptr.vmem [resolvable:$true] %s639
      %645 = dma.vmem_to_hbm [thread:$0]  %s640, 256, %s5, [#allocation3], 128, 128, 8
    $region25: #{tpu_custom_call.1} parent=1 // pred_fallthru
      _
    // Predicated region
    $region26: #{tpu_custom_call.1} parent=1 // pred_check
      _
    $region27: #{tpu_custom_call.1} parent=1 // pred_check_branch
      %647 = sbr.rel (0) target = $region29
    $region28: #{tpu_custom_call.1} parent=1 // pred_region
      %648 = dma.done [#allocation3], 256
    $region29: #{tpu_custom_call.1} parent=1 // pred_fallthru
      _
    %649 = vsyncpa [#allocation3], 1

</llo_original>
